<compile_context>
chip_gen: v7x
topology: tpu7x:2x2x1
jax: 0.10.0
libtpu: 0.0.40
codegen_flags: <defaults>
</compile_context>

<pallas_src>
import math

import jax
import jax.numpy as jnp
from jax.experimental import pallas as pl
from jax.experimental.pallas import tpu as pltpu


def _round_up(x, m):
    return ((x + m - 1) // m) * m


# --------------------------------------------------------------------------- #
# Pallas kernel: fused circular-conv matmul  (Mt, 3K) @ (3K, D) + bias
# --------------------------------------------------------------------------- #
def _fused_conv_kernel(x_ref, w_ref, b_ref, o_ref):
    # x_ref : (Mt, 3K)  rows = [x_{t-1} | x_t | x_{t+1}] for flattened (b, t)
    # w_ref : (3K, D)   fused per-tap conv weights (VMEM-resident)
    # b_ref : (1, D)    bias (VMEM-resident)
    # o_ref : (Mt, D)
    acc = jnp.dot(x_ref[...], w_ref[...], preferred_element_type=jnp.float32)
    o_ref[...] = (acc + b_ref[...]).astype(o_ref.dtype)


def _pick_m_tile(m_rows, k3, d):
    """Largest row tile (<=512, multiple of 8) keeping double-buffered in/out
    tiles plus the resident weight slab comfortably under the default 32 MiB
    scoped-VMEM limit (also fine for v7x's 64 MiB physical VMEM)."""
    budget = 24 * 1024 * 1024
    w_bytes = 2 * (k3 * d + d) * 4          # weights + bias, double-buffered
    per_row = 2 * (k3 + d) * 4              # in + out bytes per row, double-buffered
    mt = (budget - w_bytes) // max(per_row, 1)
    mt = max(8, min(512, (mt // 8) * 8))
    return int(min(mt, _round_up(m_rows, 8)))


def token_embedding_pallas(x_sel, conv_w, conv_b):
    """Circular Conv1d token embedding as a single fused Pallas matmul.

    x_sel: (B, L, K) features; conv_w: (D, K, 3) PyTorch Conv1d layout;
    conv_b: (D,).  Returns (B, L, D) float32.
    """
    B, L, K = x_sel.shape
    D = conv_w.shape[0]

    x = x_sel.astype(jnp.float32)
    # Wrapper-side circular pre-rolls: each row of the fused LHS carries its
    # full receptive field -> circularity needs no in-kernel halo logic.
    xm1 = jnp.roll(x, 1, axis=1)            # x[(t-1) % L]
    xp1 = jnp.roll(x, -1, axis=1)           # x[(t+1) % L]
    x_cat = jnp.concatenate([xm1, x, xp1], axis=-1).reshape(B * L, 3 * K)

    # Fused weight slab; row block j multiplies conv tap j
    # (PyTorch circular conv: y[t] = b + sum_j W[:, :, j] @ x[(t-1+j) % L]).
    w_fused = jnp.concatenate(
        [conv_w[:, :, 0].T, conv_w[:, :, 1].T, conv_w[:, :, 2].T], axis=0
    ).astype(jnp.float32)                   # (3K, D)
    bias = conv_b.astype(jnp.float32).reshape(1, D)

    M = B * L
    Mt = _pick_m_tile(M, 3 * K, D)
    Mp = _round_up(M, Mt)
    if Mp != M:
        x_cat = jnp.pad(x_cat, ((0, Mp - M), (0, 0)))

    out_flat = pl.pallas_call(
        _fused_conv_kernel,
        out_shape=jax.ShapeDtypeStruct((Mp, D), jnp.float32),
        grid_spec=pltpu.PrefetchScalarGridSpec(
            num_scalar_prefetch=0,
            grid=(Mp // Mt,),               # one tall row tile per grid step
            in_specs=[
                pl.BlockSpec((Mt, 3 * K), lambda i: (i, 0)),   # row tile
                pl.BlockSpec((3 * K, D), lambda i: (0, 0)),    # resident weights
                pl.BlockSpec((1, D), lambda i: (0, 0)),        # resident bias
            ],
            out_specs=pl.BlockSpec((Mt, D), lambda i: (i, 0)),
        ),
        compiler_params=pltpu.CompilerParams(
            dimension_semantics=("parallel",),
        ),
    )(x_cat, w_fused, bias)

    if Mp != M:
        out_flat = out_flat[:M]
    return out_flat.reshape(B, L, D)


# --------------------------------------------------------------------------- #
# Pure-JAX reference for the circular Conv1d (independent of the kernel)
# --------------------------------------------------------------------------- #
def token_embedding_ref(x_sel, conv_w, conv_b):
    x = jnp.transpose(x_sel.astype(jnp.float32), (0, 2, 1))           # (B, K, L)
    xpad = jnp.concatenate([x[:, :, -1:], x, x[:, :, :1]], axis=-1)   # circular pad 1
    y = jax.lax.conv_general_dilated(
        xpad, conv_w.astype(jnp.float32), window_strides=(1,), padding="VALID",
        dimension_numbers=("NCH", "OIH", "NCH"),
        precision=jax.lax.Precision.HIGHEST)
    y = y + conv_b[None, :, None]
    return jnp.transpose(y, (0, 2, 1))                                # (B, L, D)


def token_embedding(x_sel, conv_w, conv_b, use_pallas=None):
    # dim handling mirroring TokenEmbedding.forward
    if x_sel.ndim == 2:
        x_sel = x_sel[None]
    elif x_sel.ndim == 4:
        x_sel = jnp.squeeze(x_sel, axis=-1)
    B, L, _ = x_sel.shape
    D = conv_w.shape[0]
    if use_pallas is None:
        # gate by problem size: pallas_call fixed overhead dwarfs tiny problems
        use_pallas = B * L * max(D, 128) >= (1 << 17)
    if use_pallas:
        return token_embedding_pallas(x_sel, conv_w, conv_b)
    return token_embedding_ref(x_sel, conv_w, conv_b)


# --------------------------------------------------------------------------- #
# Feature-importance network + selection (tiny, plain JAX)
# --------------------------------------------------------------------------- #
def compute_feature_importance(params, x, selection_method="importance"):
    if selection_method == "importance":
        m = x.mean(axis=(0, 1))                                    # (C,)
        h = m @ params["fi_w1"].T + params["fi_b1"]                # (D,)
        # TODO(synk): nn.BatchNorm1d rejects the 1-D vector the original module
        # feeds it; implemented here as eval-mode BN with default running stats.
        h = (h - params["bn_mean"]) / jnp.sqrt(params["bn_var"] + 1e-5)
        h = h * params["bn_gamma"] + params["bn_beta"]
        h = jnp.maximum(h, 0.0)
        s = h @ params["fi_w2"].T + params["fi_b2"]                # (C,)
        s = jax.nn.sigmoid(s)
    elif selection_method == "variance":
        s = jnp.std(x, axis=(0, 1), ddof=1)
    else:
        s = jnp.ones((x.shape[-1],), x.dtype)
    return jax.nn.softmax(s, axis=-1)


def feature_selection_embedding(params, x, threshold=0.1,
                                selection_method="importance", use_pallas=None):
    """Forward: returns (embedded_features (B, L, D), selected_indices (K,))."""
    C = x.shape[-1]
    scores = compute_feature_importance(params, x, selection_method)
    top_k = max(1, int(C * threshold))
    k = min(top_k, C)
    # TODO(synk): the original module builds Conv1d(in_channels=c_in) but feeds
    # it the K selected channels; that only runs when K == c_in.  Here the conv
    # is sized to K so the forward pass is actually runnable.
    assert params["conv_w"].shape[1] == k, "conv sized for a different k"
    _, sel_idx = jax.lax.top_k(scores, k)
    x_sel = jnp.take(x, sel_idx, axis=-1)                          # (B, L, K)
    emb = token_embedding(x_sel, params["conv_w"], params["conv_b"],
                          use_pallas=use_pallas)
    return emb, sel_idx


# --------------------------------------------------------------------------- #
# Parameter init (matching the PyTorch module's shapes / init style)
# --------------------------------------------------------------------------- #
def init_params(key, c_in, d_model, k_selected):
    k1, k2, k3, k4 = jax.random.split(key, 4)
    fi_w1 = jax.random.normal(k1, (d_model, c_in), jnp.float32) / math.sqrt(c_in)
    fi_b1 = jnp.zeros((d_model,), jnp.float32)
    fi_w2 = jax.random.normal(k2, (c_in, d_model), jnp.float32) / math.sqrt(d_model)
    fi_b2 = jnp.zeros((c_in,), jnp.float32)
    bn_gamma = jnp.ones((d_model,), jnp.float32)
    bn_beta = jnp.zeros((d_model,), jnp.float32)
    bn_mean = jnp.zeros((d_model,), jnp.float32)
    bn_var = jnp.ones((d_model,), jnp.float32)
    # TokenEmbedding conv: kaiming_normal(fan_in, leaky_relu) on (D, K, 3)
    fan_in = k_selected * 3
    gain = math.sqrt(2.0 / (1.0 + 0.01 ** 2))
    conv_w = jax.random.normal(k3, (d_model, k_selected, 3), jnp.float32) * (
        gain / math.sqrt(fan_in))
    bound = 1.0 / math.sqrt(fan_in)
    conv_b = jax.random.uniform(k4, (d_model,), jnp.float32, -bound, bound)
    return dict(fi_w1=fi_w1, fi_b1=fi_b1, fi_w2=fi_w2, fi_b2=fi_b2,
                bn_gamma=bn_gamma, bn_beta=bn_beta, bn_mean=bn_mean,
                bn_var=bn_var, conv_w=conv_w, conv_b=conv_b)


# --------------------------------------------------------------------------- #
if __name__ == "__main__":
    B, L, C, d_model = 2, 8, 4, 32
    threshold = 0.5                      # K = max(1, int(4 * 0.5)) = 2

    key = jax.random.PRNGKey(0)
    kx, kp = jax.random.split(key)
    x = jax.random.normal(kx, (B, L, C), dtype=jnp.float32)

    k_sel = max(1, int(C * threshold))
    params = init_params(kp, C, d_model, k_sel)

    # force the Pallas path (demo is below the auto-fallback size gate)
    emb, sel_idx = feature_selection_embedding(params, x, threshold=threshold,
                                               use_pallas=True)
    emb = jax.block_until_ready(emb)

    # reference path (same selection, XLA conv for the embedding)
    scores = compute_feature_importance(params, x)
    _, idx_ref = jax.lax.top_k(scores, k_sel)
    x_sel_ref = jnp.take(x, idx_ref, axis=-1)
    ref = token_embedding_ref(x_sel_ref, params["conv_w"], params["conv_b"])

    assert emb.shape == (B, L, d_model), f"bad output shape {emb.shape}"
    assert jnp.array_equal(sel_idx, idx_ref), "selected indices mismatch"
    assert jnp.allclose(emb, ref, atol=2e-3, rtol=2e-3), "mismatch vs reference"

    print("KERNEL_OK")
</pallas_src>

<mosaic_0001>
module attributes {stable_mosaic.version = 11 : i64} {
  func.func @_fused_conv_kernel(%arg0: i32, %arg1: memref<16x6xf32, #tpu.memory_space<vmem>>, %arg2: memref<6x32xf32, #tpu.memory_space<vmem>>, %arg3: memref<1x32xf32, #tpu.memory_space<vmem>>, %arg4: memref<16x32xf32, #tpu.memory_space<vmem>>) attributes {dimension_semantics = [#tpu.dimension_semantics<parallel>], iteration_bounds = array<i64: 1>, scalar_prefetch = 0 : i64, scratch_operands = 0 : i64, tpu.core_type = #tpu.core_type<tc>, window_params = [{transform_indices = @transform_0, window_bounds = array<i64: 16, 6>}, {pipeline_mode = #tpu.pipeline_mode<synchronous>, transform_indices = @transform_1, window_bounds = array<i64: 6, 32>}, {pipeline_mode = #tpu.pipeline_mode<synchronous>, transform_indices = @transform_2, window_bounds = array<i64: 1, 32>}, {transform_indices = @transform_3, window_bounds = array<i64: 16, 32>}]} {
    %c0 = arith.constant 0 : index
    %c0_0 = arith.constant 0 : index
    %0 = vector.load %arg1[%c0, %c0_0] : memref<16x6xf32, #tpu.memory_space<vmem>>, vector<16x6xf32>
    %c0_1 = arith.constant 0 : index
    %c0_2 = arith.constant 0 : index
    %1 = vector.load %arg2[%c0_1, %c0_2] : memref<6x32xf32, #tpu.memory_space<vmem>>, vector<6x32xf32>
    %cst = arith.constant dense<0.000000e+00> : vector<16x32xf32>
    %2 = tpu.matmul %0, %1, %cst {dimension_numbers = #tpu.dot_dimension_numbers<[1], [0], [0], [1], [0, 0, 1, 1], [], []>} : vector<16x6xf32>, vector<6x32xf32>, vector<16x32xf32> -> vector<16x32xf32>
    %c0_3 = arith.constant 0 : index
    %c0_4 = arith.constant 0 : index
    %3 = vector.load %arg3[%c0_3, %c0_4] : memref<1x32xf32, #tpu.memory_space<vmem>>, vector<1x32xf32>
    %4 = vector.broadcast %3 : vector<1x32xf32> to vector<16x32xf32>
    %5 = arith.addf %2, %4 : vector<16x32xf32>
    %c0_5 = arith.constant 0 : index
    %c0_6 = arith.constant 0 : index
    %6 = vector.load %arg4[%c0_5, %c0_6] : memref<16x32xf32, #tpu.memory_space<vmem>>, vector<16x32xf32>
    tpu.vector_store %arg4[%c0_5, %c0_6], %5 {strides = array<i32>} : memref<16x32xf32, #tpu.memory_space<vmem>>, vector<16x32xf32>,
    return
  }
  func.func @transform_0(%arg0: i32) -> (i32, i32) {
    %c0_i32 = arith.constant 0 : i32
    %c0_i32_0 = arith.constant 0 : i32
    return %arg0, %c0_i32 : i32, i32
  }
  func.func @transform_1(%arg0: i32) -> (i32, i32) {
    %c0_i32 = arith.constant 0 : i32
    %c0_i32_0 = arith.constant 0 : i32
    %c0_i32_1 = arith.constant 0 : i32
    return %c0_i32, %c0_i32_0 : i32, i32
  }
  func.func @transform_2(%arg0: i32) -> (i32, i32) {
    %c0_i32 = arith.constant 0 : i32
    %c0_i32_0 = arith.constant 0 : i32
    %c0_i32_1 = arith.constant 0 : i32
    return %c0_i32, %c0_i32_0 : i32, i32
  }
  func.func @transform_3(%arg0: i32) -> (i32, i32) {
    %c0_i32 = arith.constant 0 : i32
    %c0_i32_0 = arith.constant 0 : i32
    return %arg0, %c0_i32 : i32, i32
  }
}

</mosaic_0001>

<llo_original>
// kernel: tpu_custom_call.1
$region0: #{tpu_custom_call.1}
  #allocation0 [shape = 'u32[]', space=smem, size = 0x4, offset = 0x4, fixed_abs, tag = 'smem constant byte address 0x4 - core index']
  #allocation1 [shape = 'u32[144,128]{1,0:T(1,128)}', space=vmem, size = 0x12000, scoped, tag = 'internal scratch']
  %s0 = inlined_call_operand.vmem [shape: f32[16,6], index: 0, kind: input, shape index: {}]
  %s1 = inlined_call_operand.vmem [shape: f32[6,32], index: 1, kind: input, shape index: {}]
  %s2 = inlined_call_operand.vmem [shape: f32[1,32], index: 2, kind: input, shape index: {}]
  %s3 = inlined_call_operand.hbm [shape: f32[16,32], index: 3, kind: output, shape index: {}]
  %s4 = sld [smem:[#allocation0]]
  $region22: #{tpu_custom_call.1} parent=0
    _
  %s6 = ssub.s32 1, %s4
  %s7 = scalar_select 0, %s6, %s4
  $region1: #{tpu_custom_call.1} parent=0
    #allocation2 [shape = 'u8[8192]{0}', space=vmem, size = 0x2000, scoped, tag = 'output window, operand 0, single buffered']
    #allocation3 [shape = 's32[1]{0}', space=sflag, size = 0x4, scoped, tag = 'scoped memory for tpu_custom_call.1']
    %8 = vsyncpa [#allocation3], 0
    // Predicated region
    $region2: #{tpu_custom_call.1} parent=1 // pred_check
      _
    $region3: #{tpu_custom_call.1} parent=1 // pred_check_branch
      %10 = sbr.rel (0) target = $region5
    $region4: #{tpu_custom_call.1} parent=1 // pred_region
      _
    $region5: #{tpu_custom_call.1} parent=1 // pred_fallthru
      _
    // Predicated region
    $region6: #{tpu_custom_call.1} parent=1 // pred_check
      _
    $region7: #{tpu_custom_call.1} parent=1 // pred_check_branch
      %12 = sbr.rel (0) target = $region9
    $region8: #{tpu_custom_call.1} parent=1 // pred_region
      _
    $region9: #{tpu_custom_call.1} parent=1 // pred_fallthru
      _
    // Predicated region
    $region10: #{tpu_custom_call.1} parent=1 // pred_check
      _
    $region11: #{tpu_custom_call.1} parent=1 // pred_check_branch
      %14 = sbr.rel (0) target = $region13
    $region12: #{tpu_custom_call.1} parent=1 // pred_region
      _
    $region13: #{tpu_custom_call.1} parent=1 // pred_fallthru
      _
    %v15 = vld [vmem:[%s0] sm:$0xff]
    %v16 = vld [vmem:[%s0 + $0x8] sm:$0xff]
    %v17 = vld [vmem:[%s1] sm:$0x3f]
    %v18 = vld [vmem:[%s2] sm:$0x1]
    %v20 = vlaneseq
    %v21 = vshrl.u32 %v20, 7
    %v22 = vsub.s32 0, %v21
    %v23 = vrot.slane %v18, %v22
    %vm25 = vcmask 48128
    %v27 = vsel %vm25, %v15, 0
    %v30 = vsel %vm25, %v16, 0
    %vm32 = vcmask 1045504
    %v34 = vsel %vm32, %v17, 0
    %36 = vmatprep.subr.mxu0 0.0
    %37 = vmatpush1.msra.mxu0 %v34
    %38 = vmatprep.subr.mxu0 0.0
    %39 = vmatpush1.msra.mxu0 0.0
    %40 = vmatprep.subr.mxu0 0.0
    %41 = vmatpush1.msra.mxu0 0.0
    %42 = vmatprep.subr.mxu0 0.0
    %43 = vmatpush1.msra.mxu0 0.0
    %44 = vmatprep.subr.mxu0 0.0
    %45 = vmatpush1.msra.mxu0 0.0
    %46 = vmatprep.subr.mxu0 0.0
    %47 = vmatpush1.msra.mxu0 0.0
    %48 = vmatprep.subr.mxu0 0.0
    %49 = vmatpush1.msra.mxu0 0.0
    %50 = vmatprep.subr.mxu0 0.0
    %51 = vmatpush1.msra.mxu0 0.0
    %52 = vmatprep.subr.mxu0 0.0
    %53 = vmatpush1.msra.mxu0 0.0
    %54 = vmatprep.subr.mxu0 0.0
    %55 = vmatpush1.msra.mxu0 0.0
    %56 = vmatprep.subr.mxu0 0.0
    %57 = vmatpush1.msra.mxu0 0.0
    %58 = vmatprep.subr.mxu0 0.0
    %59 = vmatpush1.msra.mxu0 0.0
    %60 = vmatprep.subr.mxu0 0.0
    %61 = vmatpush1.msra.mxu0 0.0
    %62 = vmatprep.subr.mxu0 0.0
    %63 = vmatpush1.msra.mxu0 0.0
    %64 = vmatprep.subr.mxu0 0.0
    %65 = vmatpush1.msra.mxu0 0.0
    %66 = vmatprep.subr.mxu0 0.0
    %67 = vmatpush1.msra.mxu0 0.0
    %68 = vmatprep.subr.mxu0 0.0
    %69 = vmatpush1.msra.mxu0 0.0
    %70 = vmatprep.subr.mxu0 0.0
    %71 = vmatpush1.msra.mxu0 0.0
    %72 = vmatprep.subr.mxu0 0.0
    %73 = vmatpush1.msra.mxu0 0.0
    %74 = vmatprep.subr.mxu0 0.0
    %75 = vmatpush1.msra.mxu0 0.0
    %76 = vmatprep.subr.mxu0 0.0
    %77 = vmatpush1.msra.mxu0 0.0
    %78 = vmatprep.subr.mxu0 0.0
    %79 = vmatpush1.msra.mxu0 0.0
    %80 = vmatprep.subr.mxu0 0.0
    %81 = vmatpush1.msra.mxu0 0.0
    %82 = vmatprep.subr.mxu0 0.0
    %83 = vmatpush1.msra.mxu0 0.0
    %84 = vmatprep.subr.mxu0 0.0
    %85 = vmatpush1.msra.mxu0 0.0
    %86 = vmatprep.subr.mxu0 0.0
    %87 = vmatpush1.msra.mxu0 0.0
    %88 = vmatprep.subr.mxu0 0.0
    %89 = vmatpush1.msra.mxu0 0.0
    %90 = vmatprep.subr.mxu0 0.0
    %91 = vmatpush1.msra.mxu0 0.0
    %92 = vmatprep.subr.mxu0 0.0
    %93 = vmatpush1.msra.mxu0 0.0
    %94 = vmatprep.subr.mxu0 0.0
    %95 = vmatpush1.msra.mxu0 0.0
    %96 = vmatprep.subr.mxu0 0.0
    %97 = vmatpush1.msra.mxu0 0.0
    %98 = vmatprep.subr.mxu0 0.0
    %99 = vmatpush1.msra.mxu0 0.0
    %100 = vmatprep.mubr.f32.mxu0 0.0
    %101 = vmatmul.mubr.f32.gmra.mrb[0].mxu0 %v27
    %v102 = vpop.f32.mrb[0].mxu0
    %v103 = vadd.f32 %v23, %v102
    %v104 = vpop.f32.mrb[0].mxu0
    %105 = vmatprep.mubr.f32.mxu0 0.0
    %106 = vmatmul.mubr.f32.gmra.mrb[0].mxu0 %v30
    %v107 = vpop.f32.mrb[0].mxu0
    %v108 = vadd.f32 %v23, %v107
    %v109 = vpop.f32.mrb[0].mxu0
    %110 = vdwg.mxu0
    %vm111 = vcmask 261120
    %112 = vst.msk [vmem:[#allocation2] sm:$0xff] %vm111, %v103
    %113 = vst.msk [vmem:[#allocation2 + $0x8] sm:$0xff] %vm111, %v108
    // Predicated region
    $region14: #{tpu_custom_call.1} parent=1 // pred_check
      _
    $region15: #{tpu_custom_call.1} parent=1 // pred_check_branch
      %115 = sbr.rel (0) target = $region17
    $region16: #{tpu_custom_call.1} parent=1 // pred_region
      %s117 = ssub.s32 256, 256
      %118 = vsyncadd [#allocation3], %s117
      %s119 = sshll.u32 [#allocation2], 4
      %s120 = int_to_ptr.vmem [resolvable:$true] %s119
      %125 = dma.vmem_to_hbm [thread:$0]  %s120, 256, %s3, [#allocation3], 128, 128, 8
    $region17: #{tpu_custom_call.1} parent=1 // pred_fallthru
      _
    // Predicated region
    $region18: #{tpu_custom_call.1} parent=1 // pred_check
      _
    $region19: #{tpu_custom_call.1} parent=1 // pred_check_branch
      %127 = sbr.rel (0) target = $region21
    $region20: #{tpu_custom_call.1} parent=1 // pred_region
      %128 = dma.done [#allocation3], 256
    $region21: #{tpu_custom_call.1} parent=1 // pred_fallthru
      _
    %129 = vsyncpa [#allocation3], 1

</llo_original>
